<compile_context>
chip_gen: v6e
topology: v6e:2x2x1
jax: 0.10.0
libtpu: 0.0.40
codegen_flags: <defaults>
</compile_context>

<pallas_src>
import functools

import jax
import jax.numpy as jnp
from jax.experimental import pallas as pl
from jax.experimental.pallas import tpu as pltpu


def _num_partitions():
    """One grid partition per TensorCore (1 on v5e/v6e, 2 on megacore/v7x)."""
    try:
        info = pltpu.get_tpu_info()
        for attr in ("num_cores", "core_count", "num_tensorcores",
                     "tensor_core_count"):
            v = getattr(info, attr, None)
            if isinstance(v, int) and v > 0:
                return min(int(v), 2)
    except Exception:
        pass
    try:
        kind = jax.devices()[0].device_kind.lower()
    except Exception:
        return 1
    if any(tag in kind for tag in ("v4", "v5p", "v7")):
        return 2
    return 1


def _vmem_limit_bytes():
    """Scoped-VMEM limit with headroom below the chip's physical capacity."""
    cap = 64 * 1024 * 1024  # conservative fallback (v7x-class per-TC VMEM)
    try:
        v = getattr(pltpu.get_tpu_info(), "vmem_capacity_bytes", None)
        if isinstance(v, int) and v > 0:
            cap = v
    except Exception:
        pass
    # 128-MiB chips (v5e/v6e) -> 96 MiB; 64-MiB v7x -> 48 MiB.
    return int(min(max(cap * 3 // 4, 32 * 1024 * 1024), 96 * 1024 * 1024))


def _choose_tile_n(n, c, itemsize, vmem_limit):
    """Largest row tile that fits the padded, double-buffered VMEM footprint."""
    c_pad = ((c + 127) // 128) * 128                 # lanes round up to 128
    row_align = {4: 8, 2: 16, 1: 32}.get(itemsize, 8)  # sublane packing
    per_row = (2 * c_pad * itemsize                  # logits block, 2 buffers
               + 2 * 128 * 4                         # padded (tile_n,1) targets
               + 4 * c_pad * 4)                      # f32 temps (cast/z/exp/select)
    budget = vmem_limit // 2                         # headroom: out block, scratch,
    tn = max(row_align, (budget // per_row) // row_align * row_align)
    n_pad = ((n + row_align - 1) // row_align) * row_align
    return int(min(tn, n_pad))


def _focal_loss_kernel(x_ref, t_ref, o_ref, acc_ref, *, gamma, n_total,
                       tile_n, tiles_per_part):
    p = pl.program_id(0)   # partition (TensorCore split), "parallel"
    i = pl.program_id(1)   # tile within partition, "arbitrary" (reduction)

    @pl.when(i == 0)
    def _zero():
        acc_ref[...] = jnp.zeros_like(acc_ref)

    x = x_ref[...]                                   # [tile_n, C], input dtype
    t = t_ref[...]                                   # [tile_n, 1], int32
    tn, c = x.shape

    # Global row ids for this (possibly remainder / clamped-duplicate) tile.
    blk = p * tiles_per_part + i
    row = jax.lax.broadcasted_iota(jnp.int32, (tn, 1), 0) + blk * tile_n
    valid = row < n_total                            # [tile_n, 1] bool

    # Row-wise numerically stable log-sum-exp (the only f32 full-width pass).
    xf = x.astype(jnp.float32)
    m = jnp.max(xf, axis=1, keepdims=True)                       # [tile_n, 1]
    lse = jnp.log(jnp.sum(jnp.exp(xf - m), axis=1, keepdims=True))

    # Target gather as a single select + lane-reduce on the input dtype
    # (exact: at most one nonzero per row), no one-hot materialization.
    col = jax.lax.broadcasted_iota(jnp.int32, (tn, c), 1)
    x_t = jnp.sum(jnp.where(col == t, x, jnp.zeros_like(x)),
                  axis=1, keepdims=True).astype(jnp.float32)     # [tile_n, 1]

    logpt_t = (x_t - m) - lse                                    # [tile_n, 1]
    pt_t = jnp.exp(logpt_t)
    one_minus = 1.0 - pt_t
    if isinstance(gamma, int):
        mod = jax.lax.integer_pow(one_minus, gamma)   # multiplies, no EUP pow
    else:
        # Clamp: rounding can make (1 - pt) slightly negative -> NaN under a
        # fractional power.
        mod = jnp.maximum(one_minus, 0.0) ** gamma
    # Single guard: invalid rows (remainder / duplicated clamp blocks) are
    # selected away here, so any upstream NaN/garbage never reaches acc.
    focal_t = jnp.where(valid, mod * logpt_t, 0.0)               # [tile_n, 1]

    acc_ref[...] += jnp.sum(focal_t, axis=0, keepdims=True)

    @pl.when(i == pl.num_programs(1) - 1)
    def _emit():
        # Exactly one lane-dense (8,128) write-back per partition.
        o_ref[...] = jnp.broadcast_to(acc_ref[...], o_ref.shape)


def focal_loss(x, target, gamma=2, tile_n=None):
    """x: [N, C] float (f32 or bf16), target: [N] int. Returns scalar f32."""
    n, c = x.shape
    t = target.astype(jnp.int32).reshape(n, 1)

    num_parts = _num_partitions()
    vmem_limit = _vmem_limit_bytes()
    if tile_n is None:
        tile_n = _choose_tile_n(n, c, x.dtype.itemsize, vmem_limit)

    total_tiles = pl.cdiv(n, tile_n)
    num_parts = max(1, min(num_parts, total_tiles))
    tiles_per_part = pl.cdiv(total_tiles, num_parts)
    grid = (num_parts, tiles_per_part)

    def _in_map(p, i):
        b = p * tiles_per_part + i
        # Clamp overflow blocks of the last partition (odd tile counts); their
        # rows get global ids >= n and are masked to zero inside the kernel.
        return (jnp.minimum(b, total_tiles - 1), 0)

    kernel = functools.partial(
        _focal_loss_kernel, gamma=gamma, n_total=n, tile_n=tile_n,
        tiles_per_part=tiles_per_part)

    out = pl.pallas_call(
        kernel,
        out_shape=jax.ShapeDtypeStruct((num_parts * 8, 128), jnp.float32),
        grid_spec=pltpu.PrefetchScalarGridSpec(
            num_scalar_prefetch=0,
            grid=grid,
            in_specs=[
                pl.BlockSpec((tile_n, c), _in_map),   # logits tile
                pl.BlockSpec((tile_n, 1), _in_map),   # targets tile (sublane col)
            ],
            out_specs=pl.BlockSpec((8, 128), lambda p, i: (p, 0)),
            scratch_shapes=[pltpu.VMEM((1, 1), jnp.float32)],
        ),
        compiler_params=pltpu.CompilerParams(
            dimension_semantics=("parallel", "arbitrary"),
            vmem_limit_bytes=vmem_limit,
        ),
    )(x, t)

    # One (8,128) slab per partition; the partial sum lives at [p*8, 0].
    partials = out[::8, 0]
    return -jnp.sum(partials) / jnp.float32(n)


def _focal_loss_ref(x, target, gamma=2):
    logpt = jax.nn.log_softmax(x.astype(jnp.float32), axis=1)
    pt = jnp.exp(logpt)
    focal = (1.0 - pt) ** gamma * logpt
    picked = jnp.take_along_axis(focal, target[:, None].astype(jnp.int32), axis=1)
    return -jnp.mean(picked)


if __name__ == "__main__":
    key = jax.random.PRNGKey(0)

    # Small shape matching the module's forward: input [N, C], target [N].
    kx, kt = jax.random.split(key)
    N, C = 8, 32
    x = jax.random.normal(kx, (N, C), dtype=jnp.float32)
    target = jax.random.randint(kt, (N,), 0, C, dtype=jnp.int32)

    loss = focal_loss(x, target, gamma=2)
    jax.block_until_ready(loss)
    ref = _focal_loss_ref(x, target, gamma=2)
    assert jnp.allclose(loss, ref, rtol=1e-5, atol=1e-6), (loss, ref)

    # Exercise multi-tile accumulation, the remainder-row mask and the
    # partition split with a non-divisible N and odd C.
    kx2, kt2 = jax.random.split(jax.random.PRNGKey(1))
    N2, C2 = 200, 21
    x2 = jax.random.normal(kx2, (N2, C2), dtype=jnp.float32)
    target2 = jax.random.randint(kt2, (N2,), 0, C2, dtype=jnp.int32)

    loss2 = focal_loss(x2, target2, gamma=2, tile_n=64)
    jax.block_until_ready(loss2)
    ref2 = _focal_loss_ref(x2, target2, gamma=2)
    assert jnp.allclose(loss2, ref2, rtol=1e-5, atol=1e-6), (loss2, ref2)

    # Auto-sized tile path (exercises _choose_tile_n / _vmem_limit_bytes).
    loss3 = focal_loss(x2, target2, gamma=2)
    jax.block_until_ready(loss3)
    assert jnp.allclose(loss3, ref2, rtol=1e-5, atol=1e-6), (loss3, ref2)

    print("KERNEL_OK")
</pallas_src>

<mosaic_0001>
module attributes {stable_mosaic.version = 11 : i64} {
  func.func @_focal_loss_kernel(%arg0: i32, %arg1: i32, %arg2: memref<8x32xf32, #tpu.memory_space<vmem>>, %arg3: memref<8x1xi32, #tpu.memory_space<vmem>>, %arg4: memref<8x128xf32, #tpu.memory_space<vmem>>, %arg5: memref<1x1xf32, #tpu.memory_space<vmem>>) attributes {dimension_semantics = [#tpu.dimension_semantics<parallel>, #tpu.dimension_semantics<arbitrary>], iteration_bounds = array<i64: 1, 1>, scalar_prefetch = 0 : i64, scratch_operands = 1 : i64, tpu.core_type = #tpu.core_type<tc>, window_params = [{transform_indices = @transform_0, window_bounds = array<i64: 8, 32>}, {transform_indices = @transform_1, window_bounds = array<i64: 8, 1>}, {transform_indices = @transform_2, window_bounds = array<i64: 8, 128>}]} {
    %c0_i32 = arith.constant 0 : i32
    %0 = arith.cmpi eq, %arg1, %c0_i32 : i32
    %1 = arith.extui %0 : i1 to i32
    %c0_i32_0 = arith.constant 0 : i32
    %2 = arith.cmpi ne, %1, %c0_i32_0 : i32
    scf.if %2 {
      %cst_17 = arith.constant 0.000000e+00 : f32
      %45 = vector.broadcast %cst_17 : f32 to vector<1x1xf32>
      %c0_18 = arith.constant 0 : index
      %c0_19 = arith.constant 0 : index
      %46 = vector.load %arg5[%c0_18, %c0_19] : memref<1x1xf32, #tpu.memory_space<vmem>>, vector<1x1xf32>
      tpu.vector_store %arg5[%c0_18, %c0_19], %45 {strides = array<i32>} : memref<1x1xf32, #tpu.memory_space<vmem>>, vector<1x1xf32>,
    } else {
    }
    %c0 = arith.constant 0 : index
    %c0_1 = arith.constant 0 : index
    %3 = vector.load %arg2[%c0, %c0_1] : memref<8x32xf32, #tpu.memory_space<vmem>>, vector<8x32xf32>
    %c0_2 = arith.constant 0 : index
    %c0_3 = arith.constant 0 : index
    %4 = vector.load %arg3[%c0_2, %c0_3] : memref<8x1xi32, #tpu.memory_space<vmem>>, vector<8x1xi32>
    %c1_i32 = arith.constant 1 : i32
    %5 = arith.muli %arg0, %c1_i32 : i32
    %6 = arith.addi %5, %arg1 : i32
    %7 = tpu.iota {dimensions = array<i32: 0>} : vector<8x1xi32>
    %c8_i32 = arith.constant 8 : i32
    %8 = arith.muli %6, %c8_i32 : i32
    %9 = vector.broadcast %8 : i32 to vector<8x1xi32>
    %10 = arith.addi %7, %9 : vector<8x1xi32>
    %c8_i32_4 = arith.constant 8 : i32
    %11 = vector.broadcast %c8_i32_4 : i32 to vector<8x1xi32>
    %12 = arith.cmpi slt, %10, %11 : vector<8x1xi32>
    %cst = arith.constant dense<0xFF800000> : vector<8xf32>
    %13 = vector.multi_reduction <maximumf>, %3, %cst [1] : vector<8x32xf32> to vector<8xf32>
    %14 = vector.shape_cast %13 : vector<8xf32> to vector<8x1xf32>
    %15 = vector.broadcast %14 : vector<8x1xf32> to vector<8x32xf32>
    %16 = arith.subf %3, %15 : vector<8x32xf32>
    %17 = math.exp %16 : vector<8x32xf32>
    %cst_5 = arith.constant dense<0.000000e+00> : vector<8xf32>
    %18 = vector.multi_reduction <add>, %17, %cst_5 [1] : vector<8x32xf32> to vector<8xf32>
    %19 = vector.shape_cast %18 : vector<8xf32> to vector<8x1xf32>
    %20 = math.log %19 : vector<8x1xf32>
    %21 = tpu.iota {dimensions = array<i32: 1>} : vector<8x32xi32>
    %22 = vector.broadcast %4 : vector<8x1xi32> to vector<8x32xi32>
    %23 = arith.cmpi eq, %21, %22 : vector<8x32xi32>
    %cst_6 = arith.constant 0.000000e+00 : f32
    %24 = vector.broadcast %cst_6 : f32 to vector<8x32xf32>
    %25 = arith.select %23, %3, %24 : vector<8x32xi1>, vector<8x32xf32>
    %cst_7 = arith.constant dense<0.000000e+00> : vector<8xf32>
    %26 = vector.multi_reduction <add>, %25, %cst_7 [1] : vector<8x32xf32> to vector<8xf32>
    %27 = vector.shape_cast %26 : vector<8xf32> to vector<8x1xf32>
    %28 = arith.subf %27, %14 : vector<8x1xf32>
    %29 = arith.subf %28, %20 : vector<8x1xf32>
    %30 = math.exp %29 : vector<8x1xf32>
    %cst_8 = arith.constant 1.000000e+00 : f32
    %31 = vector.broadcast %cst_8 : f32 to vector<8x1xf32>
    %32 = arith.subf %31, %30 : vector<8x1xf32>
    %33 = arith.mulf %32, %32 : vector<8x1xf32>
    %34 = arith.mulf %33, %29 : vector<8x1xf32>
    %cst_9 = arith.constant 0.000000e+00 : f32
    %35 = vector.broadcast %cst_9 : f32 to vector<8x1xf32>
    %36 = arith.select %12, %34, %35 : vector<8x1xi1>, vector<8x1xf32>
    %c0_10 = arith.constant 0 : index
    %c0_11 = arith.constant 0 : index
    %37 = vector.load %arg5[%c0_10, %c0_11] : memref<1x1xf32, #tpu.memory_space<vmem>>, vector<1x1xf32>
    %cst_12 = arith.constant dense<0.000000e+00> : vector<1xf32>
    %38 = vector.multi_reduction <add>, %36, %cst_12 [0] : vector<8x1xf32> to vector<1xf32>
    %39 = vector.shape_cast %38 : vector<1xf32> to vector<1x1xf32>
    %40 = arith.addf %37, %39 : vector<1x1xf32>
    %c0_13 = arith.constant 0 : index
    %c0_14 = arith.constant 0 : index
    %41 = vector.load %arg5[%c0_13, %c0_14] : memref<1x1xf32, #tpu.memory_space<vmem>>, vector<1x1xf32>
    tpu.vector_store %arg5[%c0_13, %c0_14], %40 {strides = array<i32>} : memref<1x1xf32, #tpu.memory_space<vmem>>, vector<1x1xf32>,
    %c0_i32_15 = arith.constant 0 : i32
    %42 = arith.cmpi eq, %arg1, %c0_i32_15 : i32
    %43 = arith.extui %42 : i1 to i32
    %c0_i32_16 = arith.constant 0 : i32
    %44 = arith.cmpi ne, %43, %c0_i32_16 : i32
    scf.if %44 {
      %c0_17 = arith.constant 0 : index
      %c0_18 = arith.constant 0 : index
      %45 = vector.load %arg5[%c0_17, %c0_18] : memref<1x1xf32, #tpu.memory_space<vmem>>, vector<1x1xf32>
      %46 = vector.shape_cast %45 : vector<1x1xf32> to vector<1x1xf32>
      %47 = vector.broadcast %46 : vector<1x1xf32> to vector<8x128xf32>
      %c0_19 = arith.constant 0 : index
      %c0_20 = arith.constant 0 : index
      %48 = vector.load %arg4[%c0_19, %c0_20] : memref<8x128xf32, #tpu.memory_space<vmem>>, vector<8x128xf32>
      tpu.vector_store %arg4[%c0_19, %c0_20], %47 {strides = array<i32>} : memref<8x128xf32, #tpu.memory_space<vmem>>, vector<8x128xf32>,
    } else {
    }
    return
  }
  func.func @transform_0(%arg0: i32, %arg1: i32) -> (i32, i32) {
    %c1_i32 = arith.constant 1 : i32
    %0 = arith.muli %arg0, %c1_i32 : i32
    %1 = arith.addi %0, %arg1 : i32
    %c0_i32 = arith.constant 0 : i32
    %2 = arith.minsi %1, %c0_i32 : i32
    %c0_i32_0 = arith.constant 0 : i32
    %c0_i32_1 = arith.constant 0 : i32
    return %2, %c0_i32_0 : i32, i32
  }
  func.func @transform_1(%arg0: i32, %arg1: i32) -> (i32, i32) {
    %c1_i32 = arith.constant 1 : i32
    %0 = arith.muli %arg0, %c1_i32 : i32
    %1 = arith.addi %0, %arg1 : i32
    %c0_i32 = arith.constant 0 : i32
    %2 = arith.minsi %1, %c0_i32 : i32
    %c0_i32_0 = arith.constant 0 : i32
    %c0_i32_1 = arith.constant 0 : i32
    return %2, %c0_i32_0 : i32, i32
  }
  func.func @transform_2(%arg0: i32, %arg1: i32) -> (i32, i32) {
    %c0_i32 = arith.constant 0 : i32
    %c0_i32_0 = arith.constant 0 : i32
    return %arg0, %c0_i32 : i32, i32
  }
}

</mosaic_0001>

<llo_original>
// kernel: tpu_custom_call.1
$region0: #{tpu_custom_call.1}
  #allocation0 [shape = 'u32[]', space=smem, size = 0x4, offset = 0x4, fixed_abs, tag = 'smem constant byte address 0x4 - core index']
  #allocation1 [shape = 'u32[144,128]{1,0:T(1,128)}', space=vmem, size = 0x12000, scoped, tag = 'internal scratch']
  #allocation2 [shape = 'f32[1,1]{1,0:T(1,128)}', space=vmem, size = 0x200, scoped, tag = 'scratch operand']
  %s0 = inlined_call_operand.vmem [shape: f32[8,32], index: 0, kind: input, shape index: {}]
  %s1 = inlined_call_operand.vmem [shape: s32[8,1], index: 1, kind: input, shape index: {}]
  %s2 = inlined_call_operand.hbm [shape: f32[8,128], index: 2, kind: output, shape index: {}]
  %s3 = sld [smem:[#allocation0]]
  $region26: #{tpu_custom_call.1} parent=0
    _
  %s5 = ssub.s32 1, %s3
  %s6 = scalar_select 0, %s5, %s3
  $region1: #{tpu_custom_call.1} parent=0
    #allocation3 [shape = 'u8[4096]{0}', space=vmem, size = 0x1000, scoped, tag = 'output window, operand 0, single buffered']
    #allocation4 [shape = 's32[1]{0}', space=sflag, size = 0x4, scoped, tag = 'scoped memory for tpu_custom_call.1']
    %7 = vsyncpa [#allocation4], 0
    // Predicated region
    $region2: #{tpu_custom_call.1} parent=1 // pred_check
      _
    $region3: #{tpu_custom_call.1} parent=1 // pred_check_branch
      %9 = sbr.rel (0) target = $region5
    $region4: #{tpu_custom_call.1} parent=1 // pred_region
      %s10 = sadd.s32 0, 0
      %p11 = scmp.lt.s32.totalorder %s10, 0
      %s12 = scalar_select %p11, %s10, 0
      %p13 = scmp.lt.s32.totalorder %s12, 0
      %s14 = scalar_select %p13, %s12, 0
      %s15 = smul.addr %s14, 8
      %s16 = scalar_lea.vmem %s0, %s15
      %s17 = sadd.s32 0, 0
      %p18 = scmp.lt.s32.totalorder %s17, 0
      %s19 = scalar_select %p18, %s17, 0
    $region5: #{tpu_custom_call.1} parent=1 // pred_fallthru
      _
    // Predicated region
    $region6: #{tpu_custom_call.1} parent=1 // pred_check
      _
    $region7: #{tpu_custom_call.1} parent=1 // pred_check_branch
      %21 = sbr.rel (0) target = $region9
    $region8: #{tpu_custom_call.1} parent=1 // pred_region
      %s22 = sadd.s32 0, 0
      %p23 = scmp.lt.s32.totalorder %s22, 0
      %s24 = scalar_select %p23, %s22, 0
      %p25 = scmp.lt.s32.totalorder %s24, 0
      %s26 = scalar_select %p25, %s24, 0
      %s27 = smul.addr %s26, 8
      %s28 = scalar_lea.vmem %s1, %s27
      %s29 = sadd.s32 0, 0
      %p30 = scmp.lt.s32.totalorder %s29, 0
      %s31 = scalar_select %p30, %s29, 0
    $region9: #{tpu_custom_call.1} parent=1 // pred_fallthru
      _
    %s32 = sadd.s32 0, 0
    %p33 = scmp.lt.s32.totalorder %s32, 0
    %s34 = scalar_select %p33, %s32, 0
    %p35 = scmp.lt.s32.totalorder %s34, 0
    %s36 = scalar_select %p35, %s34, 0
    %s37 = smul.addr %s36, 8
    %s38 = scalar_lea.vmem %s0, %s37
    %s39 = sadd.s32 0, 0
    %p40 = scmp.lt.s32.totalorder %s39, 0
    %s41 = scalar_select %p40, %s39, 0
    %p42 = scmp.lt.s32.totalorder %s41, 0
    %s43 = scalar_select %p42, %s41, 0
    %s44 = smul.addr %s43, 8
    %s45 = scalar_lea.vmem %s1, %s44
    %s46 = sadd.s32 0, 0
    %p47 = scmp.lt.s32.totalorder %s46, 0
    %s48 = scalar_select %p47, %s46, 0
    %p49 = scmp.lt.s32.totalorder %s48, 0
    %s50 = scalar_select %p49, %s48, 0
    %s51 = smul.addr %s50, 8
    %s52 = scalar_lea.vmem %s0, %s51
    %s53 = sadd.s32 0, 0
    %p54 = scmp.lt.s32.totalorder %s53, 0
    %s55 = scalar_select %p54, %s53, 0
    %s56 = sadd.s32 0, 0
    %p57 = scmp.lt.s32.totalorder %s56, 0
    %s58 = scalar_select %p57, %s56, 0
    %p59 = scmp.lt.s32.totalorder %s58, 0
    %s60 = scalar_select %p59, %s58, 0
    %s61 = smul.addr %s60, 8
    %s62 = scalar_lea.vmem %s1, %s61
    %s63 = sadd.s32 0, 0
    %p64 = scmp.lt.s32.totalorder %s63, 0
    %s65 = scalar_select %p64, %s63, 0
    %p66 = scmp.eq.s32.totalorder 0, 0
    // Predicated region
    $region10: #{tpu_custom_call.1} parent=1 // pred_check
      %p67 = pneg %p66
    $region11: #{tpu_custom_call.1} parent=1 // pred_check_branch
      %69 = sbr.rel (%p67) target = $region13
    $region12: #{tpu_custom_call.1} parent=1 // pred_region
      %vm70 = vcmask 0
      %71 = vst.msk [vmem:[#allocation2] sm:$0x1] %vm70, 0.0
    $region13: #{tpu_custom_call.1} parent=1 // pred_fallthru
      _
    %v72 = vld [vmem:[%s52] sm:$0xff]
    %v73 = vld [vmem:[%s62] sm:$0xff]
    %s74 = sadd.s32 0, 0
    %v75 = vlaneseq
    %v76 = vshrl.u32 %v75, 7
    %s77 = smul.u32 %s74, 8
    %v78 = vstv %s77
    %v79 = vadd.s32 %v76, %v78
    %vm80 = vcmp.lt.s32.totalorder %v79, 8
    %vm81 = vcmask 261120
    %v82 = vsel %vm81, %v72, -inf
    %83 = vmax.xlane.f32.xlu0 %v82
    %v84 = vpop.xlane.xlu0 %83
    %v85 = vsub.f32 %v72, %v84
    %v86 = vmul.f32 %v85, 1.442695
    %v87 = vpow.pop %v86
    %v88 = vsel %vm81, %v87, 0.0
    %89 = vadd.xlane.f32.xlu0 %v88
    %v90 = vpop.xlane.xlu0 %89
    %v91 = vlog2.pop %v90
    %v92 = vmul.f32 %v91, 0.6931472
    %v93 = vlaneseq
    %v94 = vand.u32 %v93, 127
    %95 = vset.pattern.permute.xlu0 0
    %96 = vperm.xlu0 %95, %v73
    %v97 = vpop.permute.xlu0 %96
    %vm98 = vcmp.eq.s32.totalorder %v94, %v97
    %v99 = vsel %vm98, %v72, 0.0
    %v100 = vsel %vm81, %v99, 0.0
    %101 = vadd.xlane.f32.xlu0 %v100
    %v102 = vpop.xlane.xlu0 %101
    %v103 = vsub.f32 %v102, %v84
    %v104 = vsub.f32 %v103, %v92
    %v105 = vmul.f32 %v104, 1.442695
    %v106 = vpow.pop %v105
    %v107 = vsub.f32 1.0, %v106
    %v108 = vmul.f32 %v107, %v107
    %v109 = vmul.f32 %v108, %v104
    %v110 = vsel %vm80, %v109, 0.0
    %v111 = vld [vmem:[#allocation2] sm:$0x1]
    %v112 = vrot.slane %v110, 4
    %v113 = vadd.f32 %v110, %v112
    %v114 = vrot.slane %v113, 2
    %v115 = vadd.f32 %v113, %v114
    %v116 = vrot.slane %v115, 1
    %v117 = vadd.f32 %v115, %v116
    %v118 = vadd.f32 %v111, %v117
    %vm119 = vcmask 0
    %120 = vst.msk [vmem:[#allocation2] sm:$0x1] %vm119, %v118
    // Predicated region
    $region14: #{tpu_custom_call.1} parent=1 // pred_check
      %p121 = pneg %p66
    $region15: #{tpu_custom_call.1} parent=1 // pred_check_branch
      %123 = sbr.rel (%p121) target = $region17
    $region16: #{tpu_custom_call.1} parent=1 // pred_region
      %v124 = vld [vmem:[#allocation2] sm:$0x1]
      %v126 = vlaneseq
      %v127 = vshrl.u32 %v126, 7
      %v128 = vsub.s32 0, %v127
      %v129 = vrot.slane %v124, %v128
      %130 = vset.pattern.permute.xlu0 0
      %131 = vperm.xlu0 %130, %v129
      %v132 = vpop.permute.xlu0 %131
      %134 = vst [vmem:[#allocation3] sm:$0xff] %v132
    $region17: #{tpu_custom_call.1} parent=1 // pred_fallthru
      _
    // Predicated region
    $region18: #{tpu_custom_call.1} parent=1 // pred_check
      _
    $region19: #{tpu_custom_call.1} parent=1 // pred_check_branch
      %136 = sbr.rel (0) target = $region21
    $region20: #{tpu_custom_call.1} parent=1 // pred_region
      %s138 = ssub.s32 128, 128
      %139 = vsyncadd [#allocation4], %s138
      %s141 = sshll.u32 [#allocation3], 4
      %s142 = int_to_ptr.vmem [resolvable:$true] %s141
      %144 = dma.vmem_to_hbm [thread:$0]  %s142, 128, %s2, [#allocation4]
    $region21: #{tpu_custom_call.1} parent=1 // pred_fallthru
      _
    // Predicated region
    $region22: #{tpu_custom_call.1} parent=1 // pred_check
      _
    $region23: #{tpu_custom_call.1} parent=1 // pred_check_branch
      %146 = sbr.rel (0) target = $region25
    $region24: #{tpu_custom_call.1} parent=1 // pred_region
      %147 = dma.done [#allocation4], 128
    $region25: #{tpu_custom_call.1} parent=1 // pred_fallthru
      _
    %148 = vsyncpa [#allocation4], 1

</llo_original>
